<compile_context>
chip_gen: v5e
topology: v5e:2x2
jax: 0.10.0
libtpu: 0.0.40
codegen_flags: <defaults>
</compile_context>

<pallas_src>
import functools

import jax
import jax.numpy as jnp
from jax import lax
from jax.experimental import pallas as pl
from jax.experimental.pallas import tpu as pltpu


LANE = 128            # TPU lane width (pad hidden / class dims to this)
BATCH_ALIGN = 16      # bf16 packs 16 rows per sublane tile -> align batch tiles to 16
MAX_BATCH_TILE = 512  # bf16 MXU operands keep vreg/VMEM pressure manageable at 512
UNROLL_MAX_STEPS = 16


def _round_up(n, m):
    return ((n + m - 1) // m) * m


def _cdiv(a, b):
    return -(-a // b)


def _choose_batch_tile(batch):
    """Pick (batch_tile, padded_batch).  Tiles are multiples of BATCH_ALIGN and at
    most MAX_BATCH_TILE; whenever the batch is big enough we force >= 2 grid steps
    so the 'parallel' batch axis can shard across v7x's two TensorCores."""
    bp = _round_up(batch, BATCH_ALIGN)
    n_tiles = max(_cdiv(bp, MAX_BATCH_TILE), 2 if bp >= 2 * BATCH_ALIGN else 1)
    tile = _round_up(_cdiv(bp, n_tiles), BATCH_ALIGN)
    return tile, tile * n_tiles


# ----------------------------- Pallas kernel ---------------------------------
def birnn_kernel(x_ref, wih_ref, whh_ref, b_ref, wdec_ref, bdec_ref, out_ref):
    """x:(L,BT,D) bf16 time-major   wih:(D,Hp) bf16   whh:(Hp,Hp) bf16
    b:(1,Hp) f32   wdec:(Hp,Cp) bf16   bdec:(1,Cp) f32   out:(BT,Cp) f32.
    Hp/Cp are lane-padded with zeros; BT is the batch tile.

    Implements:  h_t = tanh(x_t @ W_ih + h_{t-1} @ W_hh + b)
                 m   = max_t h_t                       (== MaxPool1d(max_len))
                 out = m @ W_dec + b_dec
    """
    L, BT, D = x_ref.shape
    Hp = whh_ref.shape[0]

    whh = whh_ref[...]                                  # bf16, resident across steps

    # Hoisted input projection: ONE (L*BT, D) @ (D, Hp) MXU matmul for all
    # timesteps (bf16 operands, f32 accumulation).  Leading-dim reshapes only.
    x_flat = x_ref[...].reshape(L * BT, D)
    proj = (
        jnp.dot(x_flat, wih_ref[...], preferred_element_type=jnp.float32)
        + b_ref[...]
    ).reshape(L, BT, Hp)                                # f32, time-major

    h = jnp.zeros((BT, Hp), jnp.float32)

    if L <= UNROLL_MAX_STEPS:
        # Fully unrolled recurrence (L small & static).  proj[t] is a contiguous
        # (BT, Hp) slab -> no relayout on the serial h-chain.
        m = None
        for t in range(L):
            h = jnp.tanh(
                proj[t]
                + jnp.dot(h.astype(jnp.bfloat16), whh,
                          preferred_element_type=jnp.float32)
            )
            m = h if m is None else jnp.maximum(m, h)
    else:
        # Bounded-live-range path for long sequences.
        def body(t, carry):
            h, m = carry
            p_t = lax.dynamic_index_in_dim(proj, t, axis=0, keepdims=False)
            h = jnp.tanh(
                p_t + jnp.dot(h.astype(jnp.bfloat16), whh,
                              preferred_element_type=jnp.float32)
            )
            return h, jnp.maximum(m, h)

        h, m = lax.fori_loop(
            0, L, body,
            (h, jnp.full((BT, Hp), -jnp.inf, jnp.float32)),
            unroll=2,
        )

    out_ref[...] = (
        jnp.dot(m.astype(jnp.bfloat16), wdec_ref[...],
                preferred_element_type=jnp.float32)
        + bdec_ref[...]
    )


def birnn_pallas(x_lbd, w_ih, w_hh, b_rnn, w_dec, b_dec):
    """x_lbd: (L, B, D) bf16 time-major features.  Weights are lane-padded bf16,
    biases f32.  Returns (B, Cp) f32 (caller slices the class padding off)."""
    L, B, D = x_lbd.shape
    Hp = w_hh.shape[0]
    Cp = w_dec.shape[1]

    batch_tile, Bp = _choose_batch_tile(B)
    if Bp != B:
        x_lbd = jnp.pad(x_lbd, ((0, 0), (0, Bp - B), (0, 0)))

    grid = (Bp // batch_tile,)

    cost = pl.CostEstimate(
        flops=2 * Bp * L * D * Hp + 2 * Bp * L * Hp * Hp + 2 * Bp * Hp * Cp,
        transcendentals=Bp * L * Hp,
        bytes_accessed=(
            2 * x_lbd.size                                   # bf16 features
            + 2 * (w_ih.size + w_hh.size + w_dec.size)       # bf16 weights
            + 4 * (b_rnn.size + b_dec.size)                  # f32 biases
            + 4 * Bp * Cp                                    # f32 output
        ),
    )

    out = pl.pallas_call(
        birnn_kernel,
        out_shape=jax.ShapeDtypeStruct((Bp, Cp), jnp.float32),
        grid=grid,
        in_specs=[
            pl.BlockSpec((L, batch_tile, D), lambda i: (0, i, 0)),  # x: batch-tiled, time-major
            pl.BlockSpec((D, Hp), lambda i: (0, 0)),                # W_ih (whole)
            pl.BlockSpec((Hp, Hp), lambda i: (0, 0)),               # W_hh (whole)
            pl.BlockSpec((1, Hp), lambda i: (0, 0)),                # b
            pl.BlockSpec((Hp, Cp), lambda i: (0, 0)),               # W_dec (whole)
            pl.BlockSpec((1, Cp), lambda i: (0, 0)),                # b_dec
        ],
        out_specs=pl.BlockSpec((batch_tile, Cp), lambda i: (i, 0)),
        compiler_params=pltpu.CompilerParams(
            dimension_semantics=("parallel",),
            vmem_limit_bytes=32 * 1024 * 1024,   # explicit so larger tiles fit on v5e too
        ),
        cost_estimate=cost,
    )(x_lbd, w_ih, w_hh, b_rnn, w_dec, b_dec)

    return out[:B]


# ------------------------------ model wrapper ---------------------------------
def prepare_kernel_params(params):
    """Zero-pad RNN / decoder weights so hidden and class dims are lane-dense and
    cast matmul operands to bf16 (biases stay f32).  Padding is exact zeros =>
    padded hidden lanes stay 0 through tanh/max and contribute 0 to the decoder;
    padded class lanes are sliced off afterwards.  Call ONCE, outside the jitted
    forward (hoisted per review)."""
    w_ih, w_hh, b_rnn = params["w_ih"], params["w_hh"], params["b_rnn"]
    w_dec, b_dec = params["w_dec"], params["b_dec"]
    D, H = w_ih.shape
    C = w_dec.shape[1]
    Hp = _round_up(H, LANE)
    Cp = _round_up(C, LANE)
    return {
        "w_ih": jnp.pad(w_ih, ((0, 0), (0, Hp - H))).astype(jnp.bfloat16),
        "w_hh": jnp.pad(w_hh, ((0, Hp - H), (0, Hp - H))).astype(jnp.bfloat16),
        "b_rnn": jnp.pad(b_rnn, ((0, 0), (0, Hp - H))).astype(jnp.float32),
        "w_dec": jnp.pad(w_dec, ((0, Hp - H), (0, Cp - C))).astype(jnp.bfloat16),
        "b_dec": jnp.pad(b_dec, ((0, 0), (0, Cp - C))).astype(jnp.float32),
    }


@functools.partial(jax.jit, static_argnames=("label_num",))
def birnn_forward(embed_params, kernel_params, pos1, pos2, sentences, *, label_num):
    """pos1, pos2, sentences: (B, L) int32.  Returns (B, label_num) float32."""
    # TODO(synk): embedding gathers are data-dependent row lookups; kept in plain JAX
    # glue rather than a Pallas scalar-prefetch gather kernel.
    # Gather directly into TIME-MAJOR layout by transposing the (cheap) int index
    # matrices instead of the gathered feature tensors.
    sent_e = jnp.take(embed_params["embed"], sentences.T, axis=0)     # (L, B, E)
    p1_e = jnp.take(embed_params["embed_pos"], pos1.T, axis=0)        # (L, B, P)
    p2_e = jnp.take(embed_params["embed_pos"], pos2.T, axis=0)        # (L, B, P)
    feat = jnp.concatenate([sent_e, p1_e, p2_e], axis=2)              # (L, B, D)
    feat = feat.astype(jnp.bfloat16)                                  # bf16 MXU LHS / HBM traffic

    out_padded = birnn_pallas(
        feat,
        kernel_params["w_ih"], kernel_params["w_hh"], kernel_params["b_rnn"],
        kernel_params["w_dec"], kernel_params["b_dec"],
    )
    return out_padded[:, :label_num]


def init_params(key, vocab_size, emb_dim, pos_dim, label_num, hidden=64):
    D = emb_dim + 2 * pos_dim
    ks = jax.random.split(key, 8)
    scale_rnn = 1.0 / jnp.sqrt(hidden)
    scale_dec = 1.0 / jnp.sqrt(hidden)
    return {
        "embed": jax.random.normal(ks[0], (vocab_size, emb_dim), jnp.float32),
        "embed_pos": jax.random.normal(ks[1], (300, pos_dim), jnp.float32),
        # nn.RNN weights, stored transposed (input-major) for x @ W:
        "w_ih": jax.random.uniform(ks[2], (D, hidden), jnp.float32, -scale_rnn, scale_rnn),
        "w_hh": jax.random.uniform(ks[3], (hidden, hidden), jnp.float32, -scale_rnn, scale_rnn),
        "b_rnn": (
            jax.random.uniform(ks[4], (1, hidden), jnp.float32, -scale_rnn, scale_rnn)
            + jax.random.uniform(ks[5], (1, hidden), jnp.float32, -scale_rnn, scale_rnn)
        ),
        "w_dec": jax.random.uniform(ks[6], (hidden, label_num), jnp.float32, -scale_dec, scale_dec),
        "b_dec": jax.random.uniform(ks[7], (1, label_num), jnp.float32, -scale_dec, scale_dec),
    }


# ------------------------------ pure-JAX reference -----------------------------
def birnn_reference(params, pos1, pos2, sentences):
    sent_e = jnp.take(params["embed"], sentences, axis=0)
    p1_e = jnp.take(params["embed_pos"], pos1, axis=0)
    p2_e = jnp.take(params["embed_pos"], pos2, axis=0)
    x = jnp.concatenate([sent_e, p1_e, p2_e], axis=2)  # (B, L, D)
    B, L, _ = x.shape
    H = params["w_hh"].shape[0]

    def step(h, xt):
        h_new = jnp.tanh(xt @ params["w_ih"] + h @ params["w_hh"] + params["b_rnn"])
        return h_new, h_new

    _, hs = lax.scan(step, jnp.zeros((B, H), jnp.float32), jnp.transpose(x, (1, 0, 2)))
    m = jnp.max(hs, axis=0)                       # max over time == MaxPool1d(max_len)
    return m @ params["w_dec"] + params["b_dec"]


# ----------------------------------- main --------------------------------------
if __name__ == "__main__":
    # Small config consistent with the module's forward.
    vocab_size = 50
    embedding_dimension = 32
    pos_embedding_dimension = 8
    label_num = 4
    max_sentence_length = 8
    batch = 2

    key = jax.random.PRNGKey(0)
    kp_key, k1, k2, k3 = jax.random.split(key, 4)
    params = init_params(kp_key, vocab_size, embedding_dimension,
                         pos_embedding_dimension, label_num)

    sentences = jax.random.randint(k1, (batch, max_sentence_length), 0, vocab_size, jnp.int32)
    pos1 = jax.random.randint(k2, (batch, max_sentence_length), 0, 300, jnp.int32)
    pos2 = jax.random.randint(k3, (batch, max_sentence_length), 0, 300, jnp.int32)

    embed_params = {"embed": params["embed"], "embed_pos": params["embed_pos"]}
    kernel_params = prepare_kernel_params(params)    # padded + bf16, done once

    out = birnn_forward(embed_params, kernel_params, pos1, pos2, sentences,
                        label_num=label_num)
    out = jax.block_until_ready(out)

    ref = jax.block_until_ready(birnn_reference(params, pos1, pos2, sentences))
    assert out.shape == (batch, label_num), out.shape
    # bf16 MXU operands (f32 accumulation) loosen the tolerance vs. the f32 reference.
    assert jnp.allclose(out, ref, atol=5e-2, rtol=5e-2), (out, ref)

    print("KERNEL_OK")
</pallas_src>

<mosaic_0001>
module attributes {stable_mosaic.version = 11 : i64} {
  func.func @birnn_kernel(%arg0: i32, %arg1: memref<8x16x48xbf16, #tpu.memory_space<vmem>>, %arg2: memref<48x128xbf16, #tpu.memory_space<vmem>>, %arg3: memref<128x128xbf16, #tpu.memory_space<vmem>>, %arg4: memref<1x128xf32, #tpu.memory_space<vmem>>, %arg5: memref<128x128xbf16, #tpu.memory_space<vmem>>, %arg6: memref<1x128xf32, #tpu.memory_space<vmem>>, %arg7: memref<16x128xf32, #tpu.memory_space<vmem>>) attributes {dimension_semantics = [#tpu.dimension_semantics<parallel>], iteration_bounds = array<i64: 1>, scalar_prefetch = 0 : i64, scratch_operands = 0 : i64, tpu.core_type = #tpu.core_type<tc>, window_params = [{transform_indices = @transform_0, window_bounds = array<i64: 8, 16, 48>}, {pipeline_mode = #tpu.pipeline_mode<synchronous>, transform_indices = @transform_1, window_bounds = array<i64: 48, 128>}, {pipeline_mode = #tpu.pipeline_mode<synchronous>, transform_indices = @transform_2, window_bounds = array<i64: 128, 128>}, {pipeline_mode = #tpu.pipeline_mode<synchronous>, transform_indices = @transform_3, window_bounds = array<i64: 1, 128>}, {pipeline_mode = #tpu.pipeline_mode<synchronous>, transform_indices = @transform_4, window_bounds = array<i64: 128, 128>}, {pipeline_mode = #tpu.pipeline_mode<synchronous>, transform_indices = @transform_5, window_bounds = array<i64: 1, 128>}, {transform_indices = @transform_6, window_bounds = array<i64: 16, 128>}]} {
    %c0 = arith.constant 0 : index
    %c0_0 = arith.constant 0 : index
    %0 = vector.load %arg3[%c0, %c0_0] : memref<128x128xbf16, #tpu.memory_space<vmem>>, vector<128x128xbf16>
    %c0_1 = arith.constant 0 : index
    %c0_2 = arith.constant 0 : index
    %c0_3 = arith.constant 0 : index
    %1 = vector.load %arg1[%c0_1, %c0_2, %c0_3] : memref<8x16x48xbf16, #tpu.memory_space<vmem>>, vector<8x16x48xbf16>
    %2 = vector.shape_cast %1 : vector<8x16x48xbf16> to vector<128x48xbf16>
    %c0_4 = arith.constant 0 : index
    %c0_5 = arith.constant 0 : index
    %3 = vector.load %arg2[%c0_4, %c0_5] : memref<48x128xbf16, #tpu.memory_space<vmem>>, vector<48x128xbf16>
    %cst = arith.constant dense<0.000000e+00> : vector<128x128xf32>
    %4 = tpu.matmul %2, %3, %cst {dimension_numbers = #tpu.dot_dimension_numbers<[1], [0], [0], [1], [0, 0, 1, 1], [], []>} : vector<128x48xbf16>, vector<48x128xbf16>, vector<128x128xf32> -> vector<128x128xf32>
    %c0_6 = arith.constant 0 : index
    %c0_7 = arith.constant 0 : index
    %5 = vector.load %arg4[%c0_6, %c0_7] : memref<1x128xf32, #tpu.memory_space<vmem>>, vector<1x128xf32>
    %6 = vector.broadcast %5 : vector<1x128xf32> to vector<128x128xf32>
    %7 = arith.addf %4, %6 : vector<128x128xf32>
    %8 = vector.shape_cast %7 : vector<128x128xf32> to vector<8x16x128xf32>
    %cst_8 = arith.constant 0.000000e+00 : f32
    %9 = vector.broadcast %cst_8 : f32 to vector<16x128xf32>
    %10 = vector.extract_strided_slice %8 {offsets = [0, 0, 0], sizes = [1, 16, 128], strides = [1, 1, 1]} : vector<8x16x128xf32> to vector<1x16x128xf32>
    %11 = vector.shape_cast %10 : vector<1x16x128xf32> to vector<16x128xf32>
    %12 = arith.truncf %9 : vector<16x128xf32> to vector<16x128xbf16>
    %cst_9 = arith.constant dense<0.000000e+00> : vector<16x128xf32>
    %13 = tpu.matmul %12, %0, %cst_9 {dimension_numbers = #tpu.dot_dimension_numbers<[1], [0], [0], [1], [0, 0, 1, 1], [], []>} : vector<16x128xbf16>, vector<128x128xbf16>, vector<16x128xf32> -> vector<16x128xf32>
    %14 = arith.addf %11, %13 : vector<16x128xf32>
    %15 = math.tanh %14 : vector<16x128xf32>
    %16 = vector.extract_strided_slice %8 {offsets = [1, 0, 0], sizes = [1, 16, 128], strides = [1, 1, 1]} : vector<8x16x128xf32> to vector<1x16x128xf32>
    %17 = vector.shape_cast %16 : vector<1x16x128xf32> to vector<16x128xf32>
    %18 = arith.truncf %15 : vector<16x128xf32> to vector<16x128xbf16>
    %cst_10 = arith.constant dense<0.000000e+00> : vector<16x128xf32>
    %19 = tpu.matmul %18, %0, %cst_10 {dimension_numbers = #tpu.dot_dimension_numbers<[1], [0], [0], [1], [0, 0, 1, 1], [], []>} : vector<16x128xbf16>, vector<128x128xbf16>, vector<16x128xf32> -> vector<16x128xf32>
    %20 = arith.addf %17, %19 : vector<16x128xf32>
    %21 = math.tanh %20 : vector<16x128xf32>
    %22 = arith.maximumf %15, %21 : vector<16x128xf32>
    %23 = vector.extract_strided_slice %8 {offsets = [2, 0, 0], sizes = [1, 16, 128], strides = [1, 1, 1]} : vector<8x16x128xf32> to vector<1x16x128xf32>
    %24 = vector.shape_cast %23 : vector<1x16x128xf32> to vector<16x128xf32>
    %25 = arith.truncf %21 : vector<16x128xf32> to vector<16x128xbf16>
    %cst_11 = arith.constant dense<0.000000e+00> : vector<16x128xf32>
    %26 = tpu.matmul %25, %0, %cst_11 {dimension_numbers = #tpu.dot_dimension_numbers<[1], [0], [0], [1], [0, 0, 1, 1], [], []>} : vector<16x128xbf16>, vector<128x128xbf16>, vector<16x128xf32> -> vector<16x128xf32>
    %27 = arith.addf %24, %26 : vector<16x128xf32>
    %28 = math.tanh %27 : vector<16x128xf32>
    %29 = arith.maximumf %22, %28 : vector<16x128xf32>
    %30 = vector.extract_strided_slice %8 {offsets = [3, 0, 0], sizes = [1, 16, 128], strides = [1, 1, 1]} : vector<8x16x128xf32> to vector<1x16x128xf32>
    %31 = vector.shape_cast %30 : vector<1x16x128xf32> to vector<16x128xf32>
    %32 = arith.truncf %28 : vector<16x128xf32> to vector<16x128xbf16>
    %cst_12 = arith.constant dense<0.000000e+00> : vector<16x128xf32>
    %33 = tpu.matmul %32, %0, %cst_12 {dimension_numbers = #tpu.dot_dimension_numbers<[1], [0], [0], [1], [0, 0, 1, 1], [], []>} : vector<16x128xbf16>, vector<128x128xbf16>, vector<16x128xf32> -> vector<16x128xf32>
    %34 = arith.addf %31, %33 : vector<16x128xf32>
    %35 = math.tanh %34 : vector<16x128xf32>
    %36 = arith.maximumf %29, %35 : vector<16x128xf32>
    %37 = vector.extract_strided_slice %8 {offsets = [4, 0, 0], sizes = [1, 16, 128], strides = [1, 1, 1]} : vector<8x16x128xf32> to vector<1x16x128xf32>
    %38 = vector.shape_cast %37 : vector<1x16x128xf32> to vector<16x128xf32>
    %39 = arith.truncf %35 : vector<16x128xf32> to vector<16x128xbf16>
    %cst_13 = arith.constant dense<0.000000e+00> : vector<16x128xf32>
    %40 = tpu.matmul %39, %0, %cst_13 {dimension_numbers = #tpu.dot_dimension_numbers<[1], [0], [0], [1], [0, 0, 1, 1], [], []>} : vector<16x128xbf16>, vector<128x128xbf16>, vector<16x128xf32> -> vector<16x128xf32>
    %41 = arith.addf %38, %40 : vector<16x128xf32>
    %42 = math.tanh %41 : vector<16x128xf32>
    %43 = arith.maximumf %36, %42 : vector<16x128xf32>
    %44 = vector.extract_strided_slice %8 {offsets = [5, 0, 0], sizes = [1, 16, 128], strides = [1, 1, 1]} : vector<8x16x128xf32> to vector<1x16x128xf32>
    %45 = vector.shape_cast %44 : vector<1x16x128xf32> to vector<16x128xf32>
    %46 = arith.truncf %42 : vector<16x128xf32> to vector<16x128xbf16>
    %cst_14 = arith.constant dense<0.000000e+00> : vector<16x128xf32>
    %47 = tpu.matmul %46, %0, %cst_14 {dimension_numbers = #tpu.dot_dimension_numbers<[1], [0], [0], [1], [0, 0, 1, 1], [], []>} : vector<16x128xbf16>, vector<128x128xbf16>, vector<16x128xf32> -> vector<16x128xf32>
    %48 = arith.addf %45, %47 : vector<16x128xf32>
    %49 = math.tanh %48 : vector<16x128xf32>
    %50 = arith.maximumf %43, %49 : vector<16x128xf32>
    %51 = vector.extract_strided_slice %8 {offsets = [6, 0, 0], sizes = [1, 16, 128], strides = [1, 1, 1]} : vector<8x16x128xf32> to vector<1x16x128xf32>
    %52 = vector.shape_cast %51 : vector<1x16x128xf32> to vector<16x128xf32>
    %53 = arith.truncf %49 : vector<16x128xf32> to vector<16x128xbf16>
    %cst_15 = arith.constant dense<0.000000e+00> : vector<16x128xf32>
    %54 = tpu.matmul %53, %0, %cst_15 {dimension_numbers = #tpu.dot_dimension_numbers<[1], [0], [0], [1], [0, 0, 1, 1], [], []>} : vector<16x128xbf16>, vector<128x128xbf16>, vector<16x128xf32> -> vector<16x128xf32>
    %55 = arith.addf %52, %54 : vector<16x128xf32>
    %56 = math.tanh %55 : vector<16x128xf32>
    %57 = arith.maximumf %50, %56 : vector<16x128xf32>
    %58 = vector.extract_strided_slice %8 {offsets = [7, 0, 0], sizes = [1, 16, 128], strides = [1, 1, 1]} : vector<8x16x128xf32> to vector<1x16x128xf32>
    %59 = vector.shape_cast %58 : vector<1x16x128xf32> to vector<16x128xf32>
    %60 = arith.truncf %56 : vector<16x128xf32> to vector<16x128xbf16>
    %cst_16 = arith.constant dense<0.000000e+00> : vector<16x128xf32>
    %61 = tpu.matmul %60, %0, %cst_16 {dimension_numbers = #tpu.dot_dimension_numbers<[1], [0], [0], [1], [0, 0, 1, 1], [], []>} : vector<16x128xbf16>, vector<128x128xbf16>, vector<16x128xf32> -> vector<16x128xf32>
    %62 = arith.addf %59, %61 : vector<16x128xf32>
    %63 = math.tanh %62 : vector<16x128xf32>
    %64 = arith.maximumf %57, %63 : vector<16x128xf32>
    %65 = arith.truncf %64 : vector<16x128xf32> to vector<16x128xbf16>
    %c0_17 = arith.constant 0 : index
    %c0_18 = arith.constant 0 : index
    %66 = vector.load %arg5[%c0_17, %c0_18] : memref<128x128xbf16, #tpu.memory_space<vmem>>, vector<128x128xbf16>
    %cst_19 = arith.constant dense<0.000000e+00> : vector<16x128xf32>
    %67 = tpu.matmul %65, %66, %cst_19 {dimension_numbers = #tpu.dot_dimension_numbers<[1], [0], [0], [1], [0, 0, 1, 1], [], []>} : vector<16x128xbf16>, vector<128x128xbf16>, vector<16x128xf32> -> vector<16x128xf32>
    %c0_20 = arith.constant 0 : index
    %c0_21 = arith.constant 0 : index
    %68 = vector.load %arg6[%c0_20, %c0_21] : memref<1x128xf32, #tpu.memory_space<vmem>>, vector<1x128xf32>
    %69 = vector.broadcast %68 : vector<1x128xf32> to vector<16x128xf32>
    %70 = arith.addf %67, %69 : vector<16x128xf32>
    %c0_22 = arith.constant 0 : index
    %c0_23 = arith.constant 0 : index
    %71 = vector.load %arg7[%c0_22, %c0_23] : memref<16x128xf32, #tpu.memory_space<vmem>>, vector<16x128xf32>
    tpu.vector_store %arg7[%c0_22, %c0_23], %70 {strides = array<i32>} : memref<16x128xf32, #tpu.memory_space<vmem>>, vector<16x128xf32>,
    return
  }
  func.func @transform_0(%arg0: i32) -> (i32, i32, i32) {
    %c0_i32 = arith.constant 0 : i32
    %c0_i32_0 = arith.constant 0 : i32
    %c0_i32_1 = arith.constant 0 : i32
    return %c0_i32, %arg0, %c0_i32_0 : i32, i32, i32
  }
  func.func @transform_1(%arg0: i32) -> (i32, i32) {
    %c0_i32 = arith.constant 0 : i32
    %c0_i32_0 = arith.constant 0 : i32
    %c0_i32_1 = arith.constant 0 : i32
    return %c0_i32, %c0_i32_0 : i32, i32
  }
  func.func @transform_2(%arg0: i32) -> (i32, i32) {
    %c0_i32 = arith.constant 0 : i32
    %c0_i32_0 = arith.constant 0 : i32
    %c0_i32_1 = arith.constant 0 : i32
    return %c0_i32, %c0_i32_0 : i32, i32
  }
  func.func @transform_3(%arg0: i32) -> (i32, i32) {
    %c0_i32 = arith.constant 0 : i32
    %c0_i32_0 = arith.constant 0 : i32
    %c0_i32_1 = arith.constant 0 : i32
    return %c0_i32, %c0_i32_0 : i32, i32
  }
  func.func @transform_4(%arg0: i32) -> (i32, i32) {
    %c0_i32 = arith.constant 0 : i32
    %c0_i32_0 = arith.constant 0 : i32
    %c0_i32_1 = arith.constant 0 : i32
    return %c0_i32, %c0_i32_0 : i32, i32
  }
  func.func @transform_5(%arg0: i32) -> (i32, i32) {
    %c0_i32 = arith.constant 0 : i32
    %c0_i32_0 = arith.constant 0 : i32
    %c0_i32_1 = arith.constant 0 : i32
    return %c0_i32, %c0_i32_0 : i32, i32
  }
  func.func @transform_6(%arg0: i32) -> (i32, i32) {
    %c0_i32 = arith.constant 0 : i32
    %c0_i32_0 = arith.constant 0 : i32
    return %arg0, %c0_i32 : i32, i32
  }
}

</mosaic_0001>

<llo_original>
// kernel: birnn_forward.1
$region0: #{birnn_forward.1}
  #allocation0 [shape = 'u32[]', space=smem, size = 0x4, offset = 0x4, fixed_abs, tag = 'smem constant byte address 0x4 - core index']
  #allocation1 [shape = 'u32[72,128]{1,0:T(1,128)}', space=vmem, size = 0x9000, scoped, tag = 'internal scratch']
  %s0 = inlined_call_operand.vmem [shape: bf16[8,16,48], index: 0, kind: input, shape index: {}]
  %s1 = inlined_call_operand.vmem [shape: bf16[48,128], index: 1, kind: input, shape index: {}]
  %s2 = inlined_call_operand.vmem [shape: bf16[128,128], index: 2, kind: input, shape index: {}]
  %s3 = inlined_call_operand.vmem [shape: f32[1,128], index: 3, kind: input, shape index: {}]
  %s4 = inlined_call_operand.vmem [shape: bf16[128,128], index: 4, kind: input, shape index: {}]
  %s5 = inlined_call_operand.vmem [shape: f32[1,128], index: 5, kind: input, shape index: {}]
  %s6 = inlined_call_operand.vmem [shape: f32[16,128], index: 6, kind: output, shape index: {}]
  %s7 = sld [smem:[#allocation0]]
  $region34: #{birnn_forward.1} parent=0
    _
  %s9 = ssub.s32 1, %s7
  %s10 = scalar_select 0, %s9, %s7
  // Predicated region
  $region2: #{birnn_forward.1} parent=0 // pred_check
    _
  $region3: #{birnn_forward.1} parent=0 // pred_check_branch
    %12 = sbr.rel (0) target = $region5
  $region4: #{birnn_forward.1} parent=0 // pred_region
    _
  $region5: #{birnn_forward.1} parent=0 // pred_fallthru
    _
  // Predicated region
  $region6: #{birnn_forward.1} parent=0 // pred_check
    _
  $region7: #{birnn_forward.1} parent=0 // pred_check_branch
    %14 = sbr.rel (0) target = $region9
  $region8: #{birnn_forward.1} parent=0 // pred_region
    _
  $region9: #{birnn_forward.1} parent=0 // pred_fallthru
    _
  // Predicated region
  $region10: #{birnn_forward.1} parent=0 // pred_check
    _
  $region11: #{birnn_forward.1} parent=0 // pred_check_branch
    %16 = sbr.rel (0) target = $region13
  $region12: #{birnn_forward.1} parent=0 // pred_region
    _
  $region13: #{birnn_forward.1} parent=0 // pred_fallthru
    _
  // Predicated region
  $region14: #{birnn_forward.1} parent=0 // pred_check
    _
  $region15: #{birnn_forward.1} parent=0 // pred_check_branch
    %18 = sbr.rel (0) target = $region17
  $region16: #{birnn_forward.1} parent=0 // pred_region
    _
  $region17: #{birnn_forward.1} parent=0 // pred_fallthru
    _
  // Predicated region
  $region18: #{birnn_forward.1} parent=0 // pred_check
    _
  $region19: #{birnn_forward.1} parent=0 // pred_check_branch
    %20 = sbr.rel (0) target = $region21
  $region20: #{birnn_forward.1} parent=0 // pred_region
    _
  $region21: #{birnn_forward.1} parent=0 // pred_fallthru
    _
  // Predicated region
  $region22: #{birnn_forward.1} parent=0 // pred_check
    _
  $region23: #{birnn_forward.1} parent=0 // pred_check_branch
    %22 = sbr.rel (0) target = $region25
  $region24: #{birnn_forward.1} parent=0 // pred_region
    _
  $region25: #{birnn_forward.1} parent=0 // pred_fallthru
    _
  %v24 = vld [vmem:[%s2] sm:$0xf]
  %v25 = vld [vmem:[%s2 + $0x4] sm:$0xf]
  %v26 = vld [vmem:[%s2 + $0x8] sm:$0xf]
  %v27 = vld [vmem:[%s2 + $0xc] sm:$0xf]
  %v28 = vld [vmem:[%s2 + $0x10] sm:$0xf]
  %v29 = vld [vmem:[%s2 + $0x14] sm:$0xf]
  %v30 = vld [vmem:[%s2 + $0x18] sm:$0xf]
  %v31 = vld [vmem:[%s2 + $0x1c] sm:$0xf]
  %v32 = vld [vmem:[%s2 + $0x20] sm:$0xf]
  %v33 = vld [vmem:[%s2 + $0x24] sm:$0xf]
  %v34 = vld [vmem:[%s2 + $0x28] sm:$0xf]
  %v35 = vld [vmem:[%s2 + $0x2c] sm:$0xf]
  %v36 = vld [vmem:[%s2 + $0x30] sm:$0xf]
  %v37 = vld [vmem:[%s2 + $0x34] sm:$0xf]
  %v38 = vld [vmem:[%s2 + $0x38] sm:$0xf]
  %v39 = vld [vmem:[%s2 + $0x3c] sm:$0xf]
  %v40 = vld [vmem:[%s0] sm:$0xf]
  %v41 = vld [vmem:[%s0 + $0x4] sm:$0xf]
  %v42 = vld [vmem:[%s0 + $0x8] sm:$0xf]
  %v43 = vld [vmem:[%s0 + $0xc] sm:$0xf]
  %v44 = vld [vmem:[%s0 + $0x10] sm:$0xf]
  %v45 = vld [vmem:[%s0 + $0x14] sm:$0xf]
  %v46 = vld [vmem:[%s0 + $0x18] sm:$0xf]
  %v47 = vld [vmem:[%s0 + $0x1c] sm:$0xf]
  %v48 = vld [vmem:[%s0 + $0x20] sm:$0xf]
  %v49 = vld [vmem:[%s0 + $0x24] sm:$0xf]
  %v50 = vld [vmem:[%s0 + $0x28] sm:$0xf]
  %v51 = vld [vmem:[%s0 + $0x2c] sm:$0xf]
  %v52 = vld [vmem:[%s0 + $0x30] sm:$0xf]
  %v53 = vld [vmem:[%s0 + $0x34] sm:$0xf]
  %v54 = vld [vmem:[%s0 + $0x38] sm:$0xf]
  %v55 = vld [vmem:[%s0 + $0x3c] sm:$0xf]
  %v56 = vld [vmem:[%s1] sm:$0xf]
  %v57 = vld [vmem:[%s1 + $0x4] sm:$0xf]
  %v58 = vld [vmem:[%s1 + $0x8] sm:$0xf]
  %v59 = vld [vmem:[%s1 + $0xc] sm:$0xf]
  %v60 = vld [vmem:[%s1 + $0x10] sm:$0xf]
  %v61 = vld [vmem:[%s1 + $0x14] sm:$0xf]
  %v62 = vld [vmem:[%s3] sm:$0x1]
  %v64 = vperm.slane %v62, 0
  %v82 = vunpack.c.l.b16 %v40
  %v83 = vunpack.c.l.b16 %v41
  %v84 = vunpack.c.l.b16 %v42
  %v85 = vunpack.c.l.b16 %v43
  %v86 = vunpack.c.l.b16 %v44
  %v87 = vunpack.c.l.b16 %v45
  %v88 = vunpack.c.l.b16 %v46
  %v89 = vunpack.c.l.b16 %v47
  %v90 = vunpack.c.l.b16 %v48
  %v91 = vunpack.c.l.b16 %v49
  %v92 = vunpack.c.l.b16 %v50
  %v93 = vunpack.c.l.b16 %v51
  %v94 = vunpack.c.l.b16 %v52
  %v95 = vunpack.c.l.b16 %v53
  %v96 = vunpack.c.l.b16 %v54
  %v97 = vunpack.c.l.b16 %v55
  %v98 = vpack.c.b16 %v83, %v82
  %v99 = vpack.c.b16 %v85, %v84
  %v100 = vpack.c.b16 %v87, %v86
  %v101 = vpack.c.b16 %v89, %v88
  %v102 = vpack.c.b16 %v91, %v90
  %v103 = vpack.c.b16 %v93, %v92
  %v104 = vpack.c.b16 %v95, %v94
  %v105 = vpack.c.b16 %v97, %v96
  %v112 = vunpack.c.l.b16 %v56
  %v113 = vunpack.c.l.b16 %v57
  %v114 = vunpack.c.l.b16 %v58
  %v115 = vunpack.c.l.b16 %v59
  %v116 = vunpack.c.l.b16 %v60
  %v117 = vunpack.c.l.b16 %v61
  %v118 = vpack.c.b16 %v113, %v112
  %v119 = vpack.c.b16 %v115, %v114
  %v120 = vpack.c.b16 %v117, %v116
  %vm124 = vcmask 392192
  %v126 = vsel %vm124, %v98, 0
  %v129 = vsel %vm124, %v99, 0
  %v132 = vsel %vm124, %v100, 0
  %v135 = vsel %vm124, %v101, 0
  %v138 = vsel %vm124, %v102, 0
  %v141 = vsel %vm124, %v103, 0
  %v144 = vsel %vm124, %v104, 0
  %v147 = vsel %vm124, %v105, 0
  %149 = vmatpush.bf16.msra.mxu0 0
  %150 = vmatpush.bf16.msra.mxu0 0
  %151 = vmatpush.bf16.msra.mxu0 0
  %152 = vmatpush.bf16.msra.mxu0 0
  %153 = vmatpush.bf16.msra.mxu0 0
  %154 = vmatpush.bf16.msra.mxu0 %v120
  %155 = vmatpush.bf16.msra.mxu0 %v119
  %156 = vmatpush.bf16.msra.mxu0 %v118
  %157 = vmatmul.bf16.gmra.mxu0 %v126
  %v158 = vpop.f32.mrf.mxu0
  %v159 = vadd.f32 %v64, %v158
  %v160 = vpop.f32.mrf.mxu0
  %v161 = vadd.f32 %v64, %v160
  %162 = vmatmul.bf16.gmra.mxu0 %v129
  %v163 = vpop.f32.mrf.mxu0
  %v164 = vadd.f32 %v64, %v163
  %v165 = vpop.f32.mrf.mxu0
  %v166 = vadd.f32 %v64, %v165
  %167 = vmatmul.bf16.gmra.mxu0 %v132
  %v168 = vpop.f32.mrf.mxu0
  %v169 = vadd.f32 %v64, %v168
  %v170 = vpop.f32.mrf.mxu0
  %v171 = vadd.f32 %v64, %v170
  %172 = vmatmul.bf16.gmra.mxu0 %v135
  %v173 = vpop.f32.mrf.mxu0
  %v174 = vadd.f32 %v64, %v173
  %v175 = vpop.f32.mrf.mxu0
  %v176 = vadd.f32 %v64, %v175
  %177 = vmatmul.bf16.gmra.mxu0 %v138
  %v178 = vpop.f32.mrf.mxu0
  %v179 = vadd.f32 %v64, %v178
  %v180 = vpop.f32.mrf.mxu0
  %v181 = vadd.f32 %v64, %v180
  %182 = vmatmul.bf16.gmra.mxu0 %v141
  %v183 = vpop.f32.mrf.mxu0
  %v184 = vadd.f32 %v64, %v183
  %v185 = vpop.f32.mrf.mxu0
  %v186 = vadd.f32 %v64, %v185
  %187 = vmatmul.bf16.gmra.mxu0 %v144
  %v188 = vpop.f32.mrf.mxu0
  %v189 = vadd.f32 %v64, %v188
  %v190 = vpop.f32.mrf.mxu0
  %v191 = vadd.f32 %v64, %v190
  %192 = vmatmul.bf16.gmra.mxu0 %v147
  %v193 = vpop.f32.mrf.mxu0
  %v194 = vadd.f32 %v64, %v193
  %v195 = vpop.f32.mrf.mxu0
  %v196 = vadd.f32 %v64, %v195
  %197 = vdwg.mxu0
  %v214 = vunpack.c.l.b16 %v24
  %v215 = vunpack.c.l.b16 %v25
  %v216 = vunpack.c.l.b16 %v26
  %v217 = vunpack.c.l.b16 %v27
  %v218 = vunpack.c.l.b16 %v28
  %v219 = vunpack.c.l.b16 %v29
  %v220 = vunpack.c.l.b16 %v30
  %v221 = vunpack.c.l.b16 %v31
  %v222 = vunpack.c.l.b16 %v32
  %v223 = vunpack.c.l.b16 %v33
  %v224 = vunpack.c.l.b16 %v34
  %v225 = vunpack.c.l.b16 %v35
  %v226 = vunpack.c.l.b16 %v36
  %v227 = vunpack.c.l.b16 %v37
  %v228 = vunpack.c.l.b16 %v38
  %v229 = vunpack.c.l.b16 %v39
  %v230 = vpack.c.b16 %v215, %v214
  %v231 = vpack.c.b16 %v217, %v216
  %v232 = vpack.c.b16 %v219, %v218
  %v233 = vpack.c.b16 %v221, %v220
  %v234 = vpack.c.b16 %v223, %v222
  %v235 = vpack.c.b16 %v225, %v224
  %v236 = vpack.c.b16 %v227, %v226
  %v237 = vpack.c.b16 %v229, %v228
  %246 = vmatpush.bf16.msra.mxu0 %v237
  %247 = vmatpush.bf16.msra.mxu0 %v236
  %248 = vmatpush.bf16.msra.mxu0 %v235
  %249 = vmatpush.bf16.msra.mxu0 %v234
  %250 = vmatpush.bf16.msra.mxu0 %v233
  %251 = vmatpush.bf16.msra.mxu0 %v232
  %252 = vmatpush.bf16.msra.mxu0 %v231
  %253 = vmatpush.bf16.msra.mxu0 %v230
  %254 = vmatmul.bf16.gmra.mxu0 0
  %v255 = vpop.f32.mrf.mxu0
  %v256 = vadd.f32 0.0, %v255
  %v257 = vpop.f32.mrf.mxu0
  %v258 = vadd.f32 0.0, %v257
  %259 = vdwg.mxu0
  %v260 = vadd.f32 %v159, %v256
  %v261 = vadd.f32 %v161, %v258
  %v262 = vtanh.pop %v260
  %v263 = vtanh.pop %v261
  %v264 = vpack.c.bf16 %v263, %v262
  %265 = vmatpush.bf16.msra.mxu0 %v237
  %266 = vmatpush.bf16.msra.mxu0 %v236
  %267 = vmatpush.bf16.msra.mxu0 %v235
  %268 = vmatpush.bf16.msra.mxu0 %v234
  %269 = vmatpush.bf16.msra.mxu0 %v233
  %270 = vmatpush.bf16.msra.mxu0 %v232
  %271 = vmatpush.bf16.msra.mxu0 %v231
  %272 = vmatpush.bf16.msra.mxu0 %v230
  %273 = vmatmul.bf16.gmra.mxu0 %v264
  %v274 = vpop.f32.mrf.mxu0
  %v275 = vadd.f32 0.0, %v274
  %v276 = vpop.f32.mrf.mxu0
  %v277 = vadd.f32 0.0, %v276
  %278 = vdwg.mxu0
  %v279 = vadd.f32 %v164, %v275
  %v280 = vadd.f32 %v166, %v277
  %v281 = vtanh.pop %v279
  %v282 = vtanh.pop %v280
  %v283 = vmax.f32 %v262, %v281
  %v284 = vmax.f32 %v263, %v282
  %v285 = vpack.c.bf16 %v282, %v281
  %286 = vmatpush.bf16.msra.mxu0 %v237
  %287 = vmatpush.bf16.msra.mxu0 %v236
  %288 = vmatpush.bf16.msra.mxu0 %v235
  %289 = vmatpush.bf16.msra.mxu0 %v234
  %290 = vmatpush.bf16.msra.mxu0 %v233
  %291 = vmatpush.bf16.msra.mxu0 %v232
  %292 = vmatpush.bf16.msra.mxu0 %v231
  %293 = vmatpush.bf16.msra.mxu0 %v230
  %294 = vmatmul.bf16.gmra.mxu0 %v285
  %v295 = vpop.f32.mrf.mxu0
  %v296 = vadd.f32 0.0, %v295
  %v297 = vpop.f32.mrf.mxu0
  %v298 = vadd.f32 0.0, %v297
  %299 = vdwg.mxu0
  %v300 = vadd.f32 %v169, %v296
  %v301 = vadd.f32 %v171, %v298
  %v302 = vtanh.pop %v300
  %v303 = vtanh.pop %v301
  %v304 = vmax.f32 %v283, %v302
  %v305 = vmax.f32 %v284, %v303
  %v306 = vpack.c.bf16 %v303, %v302
  %307 = vmatpush.bf16.msra.mxu0 %v237
  %308 = vmatpush.bf16.msra.mxu0 %v236
  %309 = vmatpush.bf16.msra.mxu0 %v235
  %310 = vmatpush.bf16.msra.mxu0 %v234
  %311 = vmatpush.bf16.msra.mxu0 %v233
  %312 = vmatpush.bf16.msra.mxu0 %v232
  %313 = vmatpush.bf16.msra.mxu0 %v231
  %314 = vmatpush.bf16.msra.mxu0 %v230
  %315 = vmatmul.bf16.gmra.mxu0 %v306
  %v316 = vpop.f32.mrf.mxu0
  %v317 = vadd.f32 0.0, %v316
  %v318 = vpop.f32.mrf.mxu0
  %v319 = vadd.f32 0.0, %v318
  %320 = vdwg.mxu0
  %v321 = vadd.f32 %v174, %v317
  %v322 = vadd.f32 %v176, %v319
  %v323 = vtanh.pop %v321
  %v324 = vtanh.pop %v322
  %v325 = vmax.f32 %v304, %v323
  %v326 = vmax.f32 %v305, %v324
  %v327 = vpack.c.bf16 %v324, %v323
  %328 = vmatpush.bf16.msra.mxu0 %v237
  %329 = vmatpush.bf16.msra.mxu0 %v236
  %330 = vmatpush.bf16.msra.mxu0 %v235
  %331 = vmatpush.bf16.msra.mxu0 %v234
  %332 = vmatpush.bf16.msra.mxu0 %v233
  %333 = vmatpush.bf16.msra.mxu0 %v232
  %334 = vmatpush.bf16.msra.mxu0 %v231
  %335 = vmatpush.bf16.msra.mxu0 %v230
  %336 = vmatmul.bf16.gmra.mxu0 %v327
  %v337 = vpop.f32.mrf.mxu0
  %v338 = vadd.f32 0.0, %v337
  %v339 = vpop.f32.mrf.mxu0
  %v340 = vadd.f32 0.0, %v339
  %341 = vdwg.mxu0
  %v342 = vadd.f32 %v179, %v338
  %v343 = vadd.f32 %v181, %v340
  %v344 = vtanh.pop %v342
  %v345 = vtanh.pop %v343
  %v346 = vmax.f32 %v325, %v344
  %v347 = vmax.f32 %v326, %v345
  %v348 = vpack.c.bf16 %v345, %v344
  %349 = vmatpush.bf16.msra.mxu0 %v237
  %350 = vmatpush.bf16.msra.mxu0 %v236
  %351 = vmatpush.bf16.msra.mxu0 %v235
  %352 = vmatpush.bf16.msra.mxu0 %v234
  %353 = vmatpush.bf16.msra.mxu0 %v233
  %354 = vmatpush.bf16.msra.mxu0 %v232
  %355 = vmatpush.bf16.msra.mxu0 %v231
  %356 = vmatpush.bf16.msra.mxu0 %v230
  %357 = vmatmul.bf16.gmra.mxu0 %v348
  %v358 = vpop.f32.mrf.mxu0
  %v359 = vadd.f32 0.0, %v358
  %v360 = vpop.f32.mrf.mxu0
  %v361 = vadd.f32 0.0, %v360
  %362 = vdwg.mxu0
  %v363 = vadd.f32 %v184, %v359
  %v364 = vadd.f32 %v186, %v361
  %v365 = vtanh.pop %v363
  %v366 = vtanh.pop %v364
  %v367 = vmax.f32 %v346, %v365
  %v368 = vmax.f32 %v347, %v366
  %v369 = vpack.c.bf16 %v366, %v365
  %370 = vmatpush.bf16.msra.mxu0 %v237
  %371 = vmatpush.bf16.msra.mxu0 %v236
  %372 = vmatpush.bf16.msra.mxu0 %v235
  %373 = vmatpush.bf16.msra.mxu0 %v234
  %374 = vmatpush.bf16.msra.mxu0 %v233
  %375 = vmatpush.bf16.msra.mxu0 %v232
  %376 = vmatpush.bf16.msra.mxu0 %v231
  %377 = vmatpush.bf16.msra.mxu0 %v230
  %378 = vmatmul.bf16.gmra.mxu0 %v369
  %v379 = vpop.f32.mrf.mxu0
  %v380 = vadd.f32 0.0, %v379
  %v381 = vpop.f32.mrf.mxu0
  %v382 = vadd.f32 0.0, %v381
  %383 = vdwg.mxu0
  %v384 = vadd.f32 %v189, %v380
  %v385 = vadd.f32 %v191, %v382
  %v386 = vtanh.pop %v384
  %v387 = vtanh.pop %v385
  %v388 = vmax.f32 %v367, %v386
  %v389 = vmax.f32 %v368, %v387
  %v390 = vpack.c.bf16 %v387, %v386
  %391 = vmatpush.bf16.msra.mxu0 %v237
  %392 = vmatpush.bf16.msra.mxu0 %v236
  %393 = vmatpush.bf16.msra.mxu0 %v235
  %394 = vmatpush.bf16.msra.mxu0 %v234
  %395 = vmatpush.bf16.msra.mxu0 %v233
  %396 = vmatpush.bf16.msra.mxu0 %v232
  %397 = vmatpush.bf16.msra.mxu0 %v231
  %398 = vmatpush.bf16.msra.mxu0 %v230
  %399 = vmatmul.bf16.gmra.mxu0 %v390
  %v400 = vpop.f32.mrf.mxu0
  %v401 = vadd.f32 0.0, %v400
  %v402 = vpop.f32.mrf.mxu0
  %v403 = vadd.f32 0.0, %v402
  %404 = vdwg.mxu0
  %v405 = vadd.f32 %v194, %v401
  %v406 = vadd.f32 %v196, %v403
  %v407 = vtanh.pop %v405
  %v408 = vtanh.pop %v406
  %v409 = vmax.f32 %v388, %v407
  %v410 = vmax.f32 %v389, %v408
  %v411 = vpack.c.bf16 %v410, %v409
  %v412 = vld [vmem:[%s4] sm:$0xf]
  %v413 = vld [vmem:[%s4 + $0x4] sm:$0xf]
  %v414 = vld [vmem:[%s4 + $0x8] sm:$0xf]
  %v415 = vld [vmem:[%s4 + $0xc] sm:$0xf]
  %v416 = vld [vmem:[%s4 + $0x10] sm:$0xf]
  %v417 = vld [vmem:[%s4 + $0x14] sm:$0xf]
  %v418 = vld [vmem:[%s4 + $0x18] sm:$0xf]
  %v419 = vld [vmem:[%s4 + $0x1c] sm:$0xf]
  %v420 = vld [vmem:[%s4 + $0x20] sm:$0xf]
  %v421 = vld [vmem:[%s4 + $0x24] sm:$0xf]
  %v422 = vld [vmem:[%s4 + $0x28] sm:$0xf]
  %v423 = vld [vmem:[%s4 + $0x2c] sm:$0xf]
  %v424 = vld [vmem:[%s4 + $0x30] sm:$0xf]
  %v425 = vld [vmem:[%s4 + $0x34] sm:$0xf]
  %v426 = vld [vmem:[%s4 + $0x38] sm:$0xf]
  %v427 = vld [vmem:[%s4 + $0x3c] sm:$0xf]
  %v428 = vld [vmem:[%s5] sm:$0x1]
  %v430 = vperm.slane %v428, 0
  %v448 = vunpack.c.l.b16 %v412
  %v449 = vunpack.c.l.b16 %v413
  %v450 = vunpack.c.l.b16 %v414
  %v451 = vunpack.c.l.b16 %v415
  %v452 = vunpack.c.l.b16 %v416
  %v453 = vunpack.c.l.b16 %v417
  %v454 = vunpack.c.l.b16 %v418
  %v455 = vunpack.c.l.b16 %v419
  %v456 = vunpack.c.l.b16 %v420
  %v457 = vunpack.c.l.b16 %v421
  %v458 = vunpack.c.l.b16 %v422
  %v459 = vunpack.c.l.b16 %v423
  %v460 = vunpack.c.l.b16 %v424
  %v461 = vunpack.c.l.b16 %v425
  %v462 = vunpack.c.l.b16 %v426
  %v463 = vunpack.c.l.b16 %v427
  %v464 = vpack.c.b16 %v449, %v448
  %v465 = vpack.c.b16 %v451, %v450
  %v466 = vpack.c.b16 %v453, %v452
  %v467 = vpack.c.b16 %v455, %v454
  %v468 = vpack.c.b16 %v457, %v456
  %v469 = vpack.c.b16 %v459, %v458
  %v470 = vpack.c.b16 %v461, %v460
  %v471 = vpack.c.b16 %v463, %v462
  %480 = vmatpush.bf16.msra.mxu0 %v471
  %481 = vmatpush.bf16.msra.mxu0 %v470
  %482 = vmatpush.bf16.msra.mxu0 %v469
  %483 = vmatpush.bf16.msra.mxu0 %v468
  %484 = vmatpush.bf16.msra.mxu0 %v467
  %485 = vmatpush.bf16.msra.mxu0 %v466
  %486 = vmatpush.bf16.msra.mxu0 %v465
  %487 = vmatpush.bf16.msra.mxu0 %v464
  %488 = vmatmul.bf16.gmra.mxu0 %v411
  %v489 = vpop.f32.mrf.mxu0
  %v490 = vadd.f32 %v430, %v489
  %v491 = vpop.f32.mrf.mxu0
  %v492 = vadd.f32 %v430, %v491
  %493 = vdwg.mxu0
  %494 = vst [vmem:[%s6] sm:$0xff] %v490
  %495 = vst [vmem:[%s6 + $0x8] sm:$0xff] %v492
  // Predicated region
  $region26: #{birnn_forward.1} parent=0 // pred_check
    _
  $region27: #{birnn_forward.1} parent=0 // pred_check_branch
    %497 = sbr.rel (0) target = $region29
  $region28: #{birnn_forward.1} parent=0 // pred_region
    _
  $region29: #{birnn_forward.1} parent=0 // pred_fallthru
    _
  // Predicated region
  $region30: #{birnn_forward.1} parent=0 // pred_check
    _
  $region31: #{birnn_forward.1} parent=0 // pred_check_branch
    %499 = sbr.rel (0) target = $region33
  $region32: #{birnn_forward.1} parent=0 // pred_region
    _
  $region33: #{birnn_forward.1} parent=0 // pred_fallthru
    _

</llo_original>
